<compile_context>
chip_gen: v5e
topology: v5e:2x2
jax: 0.10.0
libtpu: 0.0.40
codegen_flags: <defaults>
</compile_context>

<pallas_src>
import functools

import jax
import jax.numpy as jnp
from jax.experimental import pallas as pl
from jax.experimental.pallas import tpu as pltpu


# ----------------------------------------------------------------------------
# Fused Pallas kernel: one full encoder layer (attn + FFN), gridded over batch
# ----------------------------------------------------------------------------
def _encoder_layer_kernel(x_ref, ln1_ref, wqkv_ref, wo_ref, bias_ref, mask_ref,
                          ln2_ref, wi_ref, wo_ff_ref, o_ref, ctx_ref, *,
                          num_heads, d_kv, eps):
    # x_ref   : (S, D)  f32        ln1/ln2 : (1, D) f32
    # wqkv_ref: (D, 3*H*DK) bf16   wo_ref  : (H*DK, D) bf16
    # bias_ref: (H, S, S) bf16     mask_ref: (1, S) f32 (additive key mask)
    # wi_ref  : (D, 2*DFF) bf16    wo_ff   : (DFF, D) bf16
    # ctx_ref : (S, H*DK) f32 VMEM scratch
    S = x_ref.shape[0]
    HK = num_heads * d_kv
    dff = wi_ref.shape[1] // 2

    x = x_ref[...]                                             # residual (f32)

    # ---------------- attention sub-layer ----------------
    # T5LayerNorm: no mean subtraction, no bias (f32).
    var = jnp.mean(x * x, axis=-1, keepdims=True)
    nb = ((x * jax.lax.rsqrt(var + eps)) * ln1_ref[...]).astype(jnp.bfloat16)

    # Single fused, lane-dense Q|K|V projection (bf16 operands, f32 accum),
    # then cast once to bf16 so the score / ctx matmuls run as bf16 MXU ops.
    qkv = jnp.dot(nb, wqkv_ref[...],
                  preferred_element_type=jnp.float32).astype(jnp.bfloat16)

    # Hoisted mask broadcast: one (S, S) additive key mask shared by all heads.
    mask_2d = jnp.broadcast_to(mask_ref[...], (S, S))          # f32

    # TODO(synk): for production shapes (H=16, S>=512) replace this static
    # unroll with a lax.fori_loop / flash-style online softmax over KV tiles
    # and add a query-tile "parallel" grid axis (v7x: 2 TCs, 64 MiB VMEM).
    for h in range(num_heads):
        q = qkv[:, h * d_kv:(h + 1) * d_kv]                    # (S, DK) bf16
        k = qkv[:, HK + h * d_kv:HK + (h + 1) * d_kv]          # (S, DK) bf16
        v = qkv[:, 2 * HK + h * d_kv:2 * HK + (h + 1) * d_kv]  # (S, DK) bf16

        # T5 attention: NO 1/sqrt(d_kv) scaling; contract last axes (no .T).
        s = jax.lax.dot_general(q, k, (((1,), (1,)), ((), ())),
                                preferred_element_type=jnp.float32)   # (S, S)
        s = s + bias_ref[h].astype(jnp.float32) + mask_2d
        s = s - jnp.max(s, axis=-1, keepdims=True)
        p = jnp.exp(s)
        p = p * pl.reciprocal(jnp.sum(p, axis=-1, keepdims=True), approx=True)

        # ctx_h written into its column block of the (S, H*DK) scratch.
        ctx_ref[:, h * d_kv:(h + 1) * d_kv] = jnp.dot(
            p.astype(jnp.bfloat16), v, preferred_element_type=jnp.float32)

    # Single O projection with full contraction depth K = H*DK, one residual add.
    x = x + jnp.dot(ctx_ref[...].astype(jnp.bfloat16), wo_ref[...],
                    preferred_element_type=jnp.float32)        # (S, D)

    # ---------------- FFN sub-layer ----------------
    var2 = jnp.mean(x * x, axis=-1, keepdims=True)
    nb2 = ((x * jax.lax.rsqrt(var2 + eps)) * ln2_ref[...]).astype(jnp.bfloat16)

    # Fused wi_0|wi_1 matmul (N = 2*DFF, lane dense), split columns for gate.
    hfused = jnp.dot(nb2, wi_ref[...], preferred_element_type=jnp.float32)
    hg = hfused[:, :dff]
    hl = hfused[:, dff:]

    # NewGELUActivation (tanh approximation) on EUP/VPU in f32, then gate.
    c = 0.7978845608028654  # sqrt(2 / pi)
    gelu = 0.5 * hg * (1.0 + jnp.tanh(c * (hg + 0.044715 * hg * hg * hg)))
    hff = (gelu * hl).astype(jnp.bfloat16)

    o_ref[...] = x + jnp.dot(hff, wo_ff_ref[...],
                             preferred_element_type=jnp.float32)


def _rmsnorm_kernel(x_ref, w_ref, o_ref, *, eps):
    x = x_ref[...]
    var = jnp.mean(x * x, axis=-1, keepdims=True)
    o_ref[...] = (x * jax.lax.rsqrt(var + eps)) * w_ref[...]


# ----------------------------------------------------------------------------
# pallas_call wrappers
# ----------------------------------------------------------------------------
# TODO(synk): on v7x mark the constant-index weight/bias operands with
# pipeline_mode=pl.Buffered(1) to halve their VMEM residency.
def encoder_layer(x, ln1, wqkv, wo, bias, mask_add, ln2, wi, wo_ff, *,
                  num_heads, d_kv, eps=1e-6):
    B, S, D = x.shape
    HK = num_heads * d_kv

    if bias.shape[0] == 1:          # shared bias: never stream it B times
        bias_map = lambda b: (0, 0, 0, 0)
    else:                           # per-batch bias (mask already baked in)
        bias_map = lambda b: (b, 0, 0, 0)

    return pl.pallas_call(
        functools.partial(_encoder_layer_kernel, num_heads=num_heads,
                          d_kv=d_kv, eps=eps),
        out_shape=jax.ShapeDtypeStruct((B, S, D), jnp.float32),
        grid=(B,),
        in_specs=[
            pl.BlockSpec((None, S, D), lambda b: (b, 0, 0)),
            pl.BlockSpec((1, D), lambda b: (0, 0)),
            pl.BlockSpec(wqkv.shape, lambda b: (0, 0)),
            pl.BlockSpec(wo.shape, lambda b: (0, 0)),
            pl.BlockSpec((None, num_heads, S, S), bias_map),
            pl.BlockSpec((None, 1, S), lambda b: (b, 0, 0)),
            pl.BlockSpec((1, D), lambda b: (0, 0)),
            pl.BlockSpec(wi.shape, lambda b: (0, 0)),
            pl.BlockSpec(wo_ff.shape, lambda b: (0, 0)),
        ],
        out_specs=pl.BlockSpec((None, S, D), lambda b: (b, 0, 0)),
        scratch_shapes=[pltpu.VMEM((S, HK), jnp.float32)],
        compiler_params=pltpu.CompilerParams(
            dimension_semantics=("parallel",),
            vmem_limit_bytes=64 * 1024 * 1024),
    )(x, ln1, wqkv, wo, bias, mask_add, ln2, wi, wo_ff)


def rmsnorm(x, weight, eps=1e-6):
    B, S, D = x.shape
    return pl.pallas_call(
        functools.partial(_rmsnorm_kernel, eps=eps),
        out_shape=jax.ShapeDtypeStruct((B, S, D), jnp.float32),
        grid=(B,),
        in_specs=[
            pl.BlockSpec((None, S, D), lambda b: (b, 0, 0)),
            pl.BlockSpec((1, D), lambda b: (0, 0)),
        ],
        out_specs=pl.BlockSpec((None, S, D), lambda b: (b, 0, 0)),
        compiler_params=pltpu.CompilerParams(
            dimension_semantics=("parallel",),
            vmem_limit_bytes=64 * 1024 * 1024),
    )(x, weight)


# ----------------------------------------------------------------------------
# Relative position bias (integer bucket math + embedding gather = JAX glue)
# ----------------------------------------------------------------------------
def _relative_position_bucket(relative_position, num_buckets=32, max_distance=128):
    # bidirectional (encoder)
    num_buckets = num_buckets // 2
    rel_buckets = (relative_position > 0).astype(jnp.int32) * num_buckets
    n = jnp.abs(relative_position)
    max_exact = num_buckets // 2
    is_small = n < max_exact
    rel_if_large = max_exact + (
        jnp.log(jnp.maximum(n, 1).astype(jnp.float32) / max_exact)
        / jnp.log(max_distance / max_exact)
        * (num_buckets - max_exact)
    ).astype(jnp.int32)
    rel_if_large = jnp.minimum(rel_if_large, num_buckets - 1)
    return rel_buckets + jnp.where(is_small, n, rel_if_large)


def compute_position_bias(rel_bias_table, seq_len, num_buckets, max_distance):
    ctx = jnp.arange(seq_len, dtype=jnp.int32)[:, None]
    mem = jnp.arange(seq_len, dtype=jnp.int32)[None, :]
    buckets = _relative_position_bucket(mem - ctx, num_buckets, max_distance)
    values = jnp.take(rel_bias_table, buckets, axis=0)  # (S, S, H)
    return jnp.transpose(values, (2, 0, 1))[None]       # (1, H, S, S)


# ----------------------------------------------------------------------------
# T5 encoder slice (one layer / final norm)
# ----------------------------------------------------------------------------
class T5EncoderSlice:
    """Synthetic stand-in for the converted T5 encoder with convert_layer_id."""

    def __init__(self, params, *, num_heads, d_kv, num_buckets, max_distance,
                 eps=1e-6):
        self.H = num_heads
        self.DK = d_kv
        self.num_buckets = num_buckets
        self.max_distance = max_distance
        self.eps = eps
        self.rel_bias = params["rel_bias"].astype(jnp.float32)
        d_model = params["final_ln"].shape[0]
        self.final_ln = params["final_ln"].astype(jnp.float32).reshape(1, d_model)

        # One-time weight re-layout: fused Q|K|V (D, 3*H*DK), fused wi_0|wi_1
        # (D, 2*DFF), all bf16 MXU operands.  Head split/merge stays folded
        # into the (head-major) column order, so no activation transposes.
        self.layers = []
        for lyr in params["layers"]:
            D = lyr["q"].shape[0]
            self.layers.append(dict(
                ln_attn=lyr["ln_attn"].astype(jnp.float32).reshape(1, D),
                wqkv=jnp.concatenate([lyr["q"], lyr["k"], lyr["v"]],
                                     axis=1).astype(jnp.bfloat16),
                wo=lyr["o"].astype(jnp.bfloat16),               # (H*DK, D)
                ln_ff=lyr["ln_ff"].astype(jnp.float32).reshape(1, D),
                wi=jnp.concatenate([lyr["wi_0"], lyr["wi_1"]],
                                   axis=1).astype(jnp.bfloat16),
                wo_ff=lyr["wo"].astype(jnp.bfloat16),
            ))
        self.num_layers = len(self.layers)
        self._bias_cache = None   # (f32 position_bias, shared bf16 bias, mask)

    def __call__(self, inputs_embeds, attention_mask=None, position_bias=None,
                 convert_layer_id=0):
        B, S, D = inputs_embeds.shape
        # NOTE: hidden-state kernel I/O stays f32 to match the torch.float32
        # reference; internally all MXU operands are bf16.
        x = inputs_embeds.astype(jnp.float32)

        if convert_layer_id >= self.num_layers:
            # T5Stack epilogue: final RMSNorm (dropout is identity in eval).
            return (rmsnorm(x, self.final_ln, eps=self.eps),)

        if position_bias is None:
            base = compute_position_bias(
                self.rel_bias, S, self.num_buckets, self.max_distance)  # (1,H,S,S)
            kernel_bias = base.astype(jnp.bfloat16)       # shared bf16, streamed once
            if attention_mask is not None:
                ext = (1.0 - attention_mask.astype(jnp.float32))[:, None, None, :]
                ext = ext * jnp.finfo(jnp.float32).min                   # (B,1,1,S)
                position_bias = base + ext        # (B,H,S,S) returned (HF semantics)
                mask_add = ext[:, 0]              # (B,1,S) additive key mask in-kernel
            else:
                position_bias = jnp.broadcast_to(base, (B, self.H, S, S))
                mask_add = jnp.zeros((B, 1, S), jnp.float32)
            self._bias_cache = (position_bias, kernel_bias, mask_add)
        else:
            cache = self._bias_cache
            if cache is not None and position_bias is cache[0]:
                # Re-use the compact shared bf16 bias + small mask instead of
                # streaming the materialized (B,H,S,S) f32 bias every layer.
                kernel_bias, mask_add = cache[1], cache[2]
            else:
                # Fallback: stream the provided (already masked) bias in bf16.
                kernel_bias = position_bias.astype(jnp.bfloat16)
                mask_add = jnp.zeros((position_bias.shape[0], 1, S), jnp.float32)

        lyr = self.layers[convert_layer_id]
        x = encoder_layer(x, lyr["ln_attn"], lyr["wqkv"], lyr["wo"],
                          kernel_bias, mask_add, lyr["ln_ff"], lyr["wi"],
                          lyr["wo_ff"], num_heads=self.H, d_kv=self.DK,
                          eps=self.eps)
        # mimic HF T5Block outputs: (hidden, present_key_value, position_bias)
        return (x, None, position_bias)


class Block:
    """Faithful re-implementation of the PyTorch wrapper."""

    def __init__(self, encoder, layer_id):
        self.encoder = encoder
        self.convert_layer = layer_id

    def forward(self, inputs_embeds, attention_mask=None, position_bias=None):
        output = self.encoder(
            inputs_embeds,
            attention_mask=attention_mask,
            position_bias=position_bias,
            convert_layer_id=self.convert_layer,
        )
        if self.convert_layer == 0:
            hidden_state = output[0]
            position_bias = output[2]
            return (hidden_state, position_bias)
        elif self.convert_layer < 24:
            return output[0]
        else:
            return output[0]


# ----------------------------------------------------------------------------
# Deterministic parameter init + driver
# ----------------------------------------------------------------------------
def init_params(seed, num_layers, d_model, num_heads, d_kv, d_ff, num_buckets):
    key = jax.random.PRNGKey(seed)
    inner = num_heads * d_kv

    def nxt():
        nonlocal key
        key, sub = jax.random.split(key)
        return sub

    def w(shape):
        return 0.02 * jax.random.normal(nxt(), shape, jnp.float32)

    layers = []
    for _ in range(num_layers):
        layers.append(dict(
            ln_attn=1.0 + 0.02 * jax.random.normal(nxt(), (d_model,), jnp.float32),
            q=w((d_model, inner)), k=w((d_model, inner)),
            v=w((d_model, inner)), o=w((inner, d_model)),
            ln_ff=1.0 + 0.02 * jax.random.normal(nxt(), (d_model,), jnp.float32),
            wi_0=w((d_model, d_ff)), wi_1=w((d_model, d_ff)), wo=w((d_ff, d_model)),
        ))
    return dict(
        layers=layers,
        rel_bias=w((num_buckets, num_heads)),
        final_ln=1.0 + 0.02 * jax.random.normal(nxt(), (d_model,), jnp.float32),
    )


def padding_caption_mask(attention_mask, length):
    # mimics padding_caption: sets mask[0][:length] = 1
    length = min(length, attention_mask.shape[1])
    return attention_mask.at[0, :length].set(1.0)


if __name__ == "__main__":
    B, S, D = 2, 8, 32          # batch, seq, d_model
    H, DK, DFF = 4, 8, 64       # heads, d_kv, d_ff
    NUM_LAYERS = 2              # small synthetic encoder depth
    NUM_BUCKETS, MAX_DIST = 32, 128

    params = init_params(1234, NUM_LAYERS, D, H, DK, DFF, NUM_BUCKETS)
    encoder = T5EncoderSlice(params, num_heads=H, d_kv=DK,
                             num_buckets=NUM_BUCKETS, max_distance=MAX_DIST)

    key = jax.random.PRNGKey(0)
    k_emb, k_mask = jax.random.split(key)
    inputs_embeds = jax.random.normal(k_emb, (B, S, D), jnp.float32)
    # batch 1 has padding at the tail; padding_caption forces batch 0 to all-ones
    attention_mask = jnp.ones((B, S), jnp.float32).at[1, S - 3:].set(0.0)
    attention_mask = padding_caption_mask(attention_mask, 50)

    # layer 0: returns (hidden, position_bias)
    hidden, position_bias = Block(encoder, 0).forward(
        inputs_embeds, attention_mask=attention_mask)
    # intermediate layer: reuses the position bias
    hidden = Block(encoder, 1).forward(hidden, position_bias=position_bias)
    # final-norm branch (convert_layer >= num encoder layers)
    out = Block(encoder, NUM_LAYERS).forward(hidden)

    jax.block_until_ready(out)
    assert out.shape == (B, S, D)
    assert position_bias.shape == (B, H, S, S)
    print("KERNEL_OK")
</pallas_src>

<mosaic_0001>
module attributes {stable_mosaic.version = 11 : i64} {
  func.func @_encoder_layer_kernel(%arg0: i32, %arg1: memref<1x8x32xf32, #tpu.memory_space<vmem>>, %arg2: memref<1x32xf32, #tpu.memory_space<vmem>>, %arg3: memref<32x96xbf16, #tpu.memory_space<vmem>>, %arg4: memref<32x32xbf16, #tpu.memory_space<vmem>>, %arg5: memref<1x4x8x8xbf16, #tpu.memory_space<vmem>>, %arg6: memref<1x1x8xf32, #tpu.memory_space<vmem>>, %arg7: memref<1x32xf32, #tpu.memory_space<vmem>>, %arg8: memref<32x128xbf16, #tpu.memory_space<vmem>>, %arg9: memref<64x32xbf16, #tpu.memory_space<vmem>>, %arg10: memref<1x8x32xf32, #tpu.memory_space<vmem>>, %arg11: memref<8x32xf32, #tpu.memory_space<vmem>>) attributes {dimension_semantics = [#tpu.dimension_semantics<parallel>], iteration_bounds = array<i64: 2>, scalar_prefetch = 0 : i64, scratch_operands = 1 : i64, tpu.core_type = #tpu.core_type<tc>, window_params = [{transform_indices = @transform_0, window_bounds = array<i64: 1, 8, 32>}, {pipeline_mode = #tpu.pipeline_mode<synchronous>, transform_indices = @transform_1, window_bounds = array<i64: 1, 32>}, {pipeline_mode = #tpu.pipeline_mode<synchronous>, transform_indices = @transform_2, window_bounds = array<i64: 32, 96>}, {pipeline_mode = #tpu.pipeline_mode<synchronous>, transform_indices = @transform_3, window_bounds = array<i64: 32, 32>}, {pipeline_mode = #tpu.pipeline_mode<synchronous>, transform_indices = @transform_4, window_bounds = array<i64: 1, 4, 8, 8>}, {transform_indices = @transform_5, window_bounds = array<i64: 1, 1, 8>}, {pipeline_mode = #tpu.pipeline_mode<synchronous>, transform_indices = @transform_6, window_bounds = array<i64: 1, 32>}, {pipeline_mode = #tpu.pipeline_mode<synchronous>, transform_indices = @transform_7, window_bounds = array<i64: 32, 128>}, {pipeline_mode = #tpu.pipeline_mode<synchronous>, transform_indices = @transform_8, window_bounds = array<i64: 64, 32>}, {transform_indices = @transform_9, window_bounds = array<i64: 1, 8, 32>}]} {
    %c0 = arith.constant 0 : index
    %c0_0 = arith.constant 0 : index
    %c0_1 = arith.constant 0 : index
    %0 = vector.load %arg1[%c0, %c0_0, %c0_1] : memref<1x8x32xf32, #tpu.memory_space<vmem>>, vector<1x8x32xf32>
    %1 = vector.shape_cast %0 : vector<1x8x32xf32> to vector<8x32xf32>
    %2 = arith.mulf %1, %1 : vector<8x32xf32>
    %cst = arith.constant dense<0.000000e+00> : vector<8xf32>
    %3 = vector.multi_reduction <add>, %2, %cst [1] : vector<8x32xf32> to vector<8xf32>
    %4 = vector.shape_cast %3 : vector<8xf32> to vector<8x1xf32>
    %cst_2 = arith.constant 3.200000e+01 : f32
    %5 = vector.broadcast %cst_2 : f32 to vector<8x1xf32>
    %6 = arith.divf %4, %5 : vector<8x1xf32>
    %cst_3 = arith.constant 9.99999997E-7 : f32
    %7 = vector.broadcast %cst_3 : f32 to vector<8x1xf32>
    %8 = arith.addf %6, %7 : vector<8x1xf32>
    %9 = math.rsqrt %8 : vector<8x1xf32>
    %10 = vector.broadcast %9 : vector<8x1xf32> to vector<8x32xf32>
    %11 = arith.mulf %1, %10 : vector<8x32xf32>
    %c0_4 = arith.constant 0 : index
    %c0_5 = arith.constant 0 : index
    %12 = vector.load %arg2[%c0_4, %c0_5] : memref<1x32xf32, #tpu.memory_space<vmem>>, vector<1x32xf32>
    %13 = vector.broadcast %12 : vector<1x32xf32> to vector<8x32xf32>
    %14 = arith.mulf %11, %13 : vector<8x32xf32>
    %15 = arith.truncf %14 : vector<8x32xf32> to vector<8x32xbf16>
    %c0_6 = arith.constant 0 : index
    %c0_7 = arith.constant 0 : index
    %16 = vector.load %arg3[%c0_6, %c0_7] : memref<32x96xbf16, #tpu.memory_space<vmem>>, vector<32x96xbf16>
    %cst_8 = arith.constant dense<0.000000e+00> : vector<8x96xf32>
    %17 = tpu.matmul %15, %16, %cst_8 {dimension_numbers = #tpu.dot_dimension_numbers<[1], [0], [0], [1], [0, 0, 1, 1], [], []>} : vector<8x32xbf16>, vector<32x96xbf16>, vector<8x96xf32> -> vector<8x96xf32>
    %18 = arith.truncf %17 : vector<8x96xf32> to vector<8x96xbf16>
    %c0_9 = arith.constant 0 : index
    %c0_10 = arith.constant 0 : index
    %c0_11 = arith.constant 0 : index
    %19 = vector.load %arg6[%c0_9, %c0_10, %c0_11] : memref<1x1x8xf32, #tpu.memory_space<vmem>>, vector<1x1x8xf32>
    %20 = vector.shape_cast %19 : vector<1x1x8xf32> to vector<1x8xf32>
    %21 = vector.shape_cast %20 : vector<1x8xf32> to vector<1x8xf32>
    %22 = vector.broadcast %21 : vector<1x8xf32> to vector<8x8xf32>
    %23 = vector.extract_strided_slice %18 {offsets = [0, 0], sizes = [8, 8], strides = [1, 1]} : vector<8x96xbf16> to vector<8x8xbf16>
    %24 = vector.extract_strided_slice %18 {offsets = [0, 32], sizes = [8, 8], strides = [1, 1]} : vector<8x96xbf16> to vector<8x8xbf16>
    %25 = vector.extract_strided_slice %18 {offsets = [0, 64], sizes = [8, 8], strides = [1, 1]} : vector<8x96xbf16> to vector<8x8xbf16>
    %cst_12 = arith.constant dense<0.000000e+00> : vector<8x8xf32>
    %26 = tpu.matmul %23, %24, %cst_12 {dimension_numbers = #tpu.dot_dimension_numbers<[1], [1], [0], [0], [0, 0, 1, 0], [], []>} : vector<8x8xbf16>, vector<8x8xbf16>, vector<8x8xf32> -> vector<8x8xf32>
    %c0_13 = arith.constant 0 : index
    %c0_14 = arith.constant 0 : index
    %c0_15 = arith.constant 0 : index
    %c0_16 = arith.constant 0 : index
    %27 = vector.load %arg5[%c0_13, %c0_14, %c0_15, %c0_16] : memref<1x4x8x8xbf16, #tpu.memory_space<vmem>>, vector<1x1x8x8xbf16>
    %28 = vector.shape_cast %27 : vector<1x1x8x8xbf16> to vector<8x8xbf16>
    %29 = arith.extf %28 : vector<8x8xbf16> to vector<8x8xf32>
    %30 = arith.addf %26, %29 : vector<8x8xf32>
    %31 = arith.addf %30, %22 : vector<8x8xf32>
    %cst_17 = arith.constant dense<0xFF800000> : vector<8xf32>
    %32 = vector.multi_reduction <maximumf>, %31, %cst_17 [1] : vector<8x8xf32> to vector<8xf32>
    %33 = vector.shape_cast %32 : vector<8xf32> to vector<8x1xf32>
    %34 = vector.broadcast %33 : vector<8x1xf32> to vector<8x8xf32>
    %35 = arith.subf %31, %34 : vector<8x8xf32>
    %36 = math.exp %35 : vector<8x8xf32>
    %cst_18 = arith.constant dense<0.000000e+00> : vector<8xf32>
    %37 = vector.multi_reduction <add>, %36, %cst_18 [1] : vector<8x8xf32> to vector<8xf32>
    %38 = vector.shape_cast %37 : vector<8xf32> to vector<8x1xf32>
    %39 = tpu.reciprocal %38 {approx = true} : vector<8x1xf32> -> vector<8x1xf32>
    %40 = vector.broadcast %39 : vector<8x1xf32> to vector<8x8xf32>
    %41 = arith.mulf %36, %40 : vector<8x8xf32>
    %42 = arith.truncf %41 : vector<8x8xf32> to vector<8x8xbf16>
    %cst_19 = arith.constant dense<0.000000e+00> : vector<8x8xf32>
    %43 = tpu.matmul %42, %25, %cst_19 {dimension_numbers = #tpu.dot_dimension_numbers<[1], [0], [0], [1], [0, 0, 1, 1], [], []>} : vector<8x8xbf16>, vector<8x8xbf16>, vector<8x8xf32> -> vector<8x8xf32>
    %c0_20 = arith.constant 0 : index
    %c0_21 = arith.constant 0 : index
    %44 = vector.load %arg11[%c0_20, %c0_21] : memref<8x32xf32, #tpu.memory_space<vmem>>, vector<8x8xf32>
    tpu.vector_store %arg11[%c0_20, %c0_21], %43 {strides = array<i32>} : memref<8x32xf32, #tpu.memory_space<vmem>>, vector<8x8xf32>,
    %45 = vector.extract_strided_slice %18 {offsets = [0, 8], sizes = [8, 8], strides = [1, 1]} : vector<8x96xbf16> to vector<8x8xbf16>
    %46 = vector.extract_strided_slice %18 {offsets = [0, 40], sizes = [8, 8], strides = [1, 1]} : vector<8x96xbf16> to vector<8x8xbf16>
    %47 = vector.extract_strided_slice %18 {offsets = [0, 72], sizes = [8, 8], strides = [1, 1]} : vector<8x96xbf16> to vector<8x8xbf16>
    %cst_22 = arith.constant dense<0.000000e+00> : vector<8x8xf32>
    %48 = tpu.matmul %45, %46, %cst_22 {dimension_numbers = #tpu.dot_dimension_numbers<[1], [1], [0], [0], [0, 0, 1, 0], [], []>} : vector<8x8xbf16>, vector<8x8xbf16>, vector<8x8xf32> -> vector<8x8xf32>
    %c0_23 = arith.constant 0 : index
    %c1 = arith.constant 1 : index
    %c0_24 = arith.constant 0 : index
    %c0_25 = arith.constant 0 : index
    %49 = vector.load %arg5[%c0_23, %c1, %c0_24, %c0_25] : memref<1x4x8x8xbf16, #tpu.memory_space<vmem>>, vector<1x1x8x8xbf16>
    %50 = vector.shape_cast %49 : vector<1x1x8x8xbf16> to vector<8x8xbf16>
    %51 = arith.extf %50 : vector<8x8xbf16> to vector<8x8xf32>
    %52 = arith.addf %48, %51 : vector<8x8xf32>
    %53 = arith.addf %52, %22 : vector<8x8xf32>
    %cst_26 = arith.constant dense<0xFF800000> : vector<8xf32>
    %54 = vector.multi_reduction <maximumf>, %53, %cst_26 [1] : vector<8x8xf32> to vector<8xf32>
    %55 = vector.shape_cast %54 : vector<8xf32> to vector<8x1xf32>
    %56 = vector.broadcast %55 : vector<8x1xf32> to vector<8x8xf32>
    %57 = arith.subf %53, %56 : vector<8x8xf32>
    %58 = math.exp %57 : vector<8x8xf32>
    %cst_27 = arith.constant dense<0.000000e+00> : vector<8xf32>
    %59 = vector.multi_reduction <add>, %58, %cst_27 [1] : vector<8x8xf32> to vector<8xf32>
    %60 = vector.shape_cast %59 : vector<8xf32> to vector<8x1xf32>
    %61 = tpu.reciprocal %60 {approx = true} : vector<8x1xf32> -> vector<8x1xf32>
    %62 = vector.broadcast %61 : vector<8x1xf32> to vector<8x8xf32>
    %63 = arith.mulf %58, %62 : vector<8x8xf32>
    %64 = arith.truncf %63 : vector<8x8xf32> to vector<8x8xbf16>
    %cst_28 = arith.constant dense<0.000000e+00> : vector<8x8xf32>
    %65 = tpu.matmul %64, %47, %cst_28 {dimension_numbers = #tpu.dot_dimension_numbers<[1], [0], [0], [1], [0, 0, 1, 1], [], []>} : vector<8x8xbf16>, vector<8x8xbf16>, vector<8x8xf32> -> vector<8x8xf32>
    %c0_29 = arith.constant 0 : index
    %c8 = arith.constant 8 : index
    %66 = vector.load %arg11[%c0_29, %c8] : memref<8x32xf32, #tpu.memory_space<vmem>>, vector<8x8xf32>
    tpu.vector_store %arg11[%c0_29, %c8], %65 {strides = array<i32>} : memref<8x32xf32, #tpu.memory_space<vmem>>, vector<8x8xf32>,
    %67 = vector.extract_strided_slice %18 {offsets = [0, 16], sizes = [8, 8], strides = [1, 1]} : vector<8x96xbf16> to vector<8x8xbf16>
    %68 = vector.extract_strided_slice %18 {offsets = [0, 48], sizes = [8, 8], strides = [1, 1]} : vector<8x96xbf16> to vector<8x8xbf16>
    %69 = vector.extract_strided_slice %18 {offsets = [0, 80], sizes = [8, 8], strides = [1, 1]} : vector<8x96xbf16> to vector<8x8xbf16>
    %cst_30 = arith.constant dense<0.000000e+00> : vector<8x8xf32>
    %70 = tpu.matmul %67, %68, %cst_30 {dimension_numbers = #tpu.dot_dimension_numbers<[1], [1], [0], [0], [0, 0, 1, 0], [], []>} : vector<8x8xbf16>, vector<8x8xbf16>, vector<8x8xf32> -> vector<8x8xf32>
    %c0_31 = arith.constant 0 : index
    %c2 = arith.constant 2 : index
    %c0_32 = arith.constant 0 : index
    %c0_33 = arith.constant 0 : index
    %71 = vector.load %arg5[%c0_31, %c2, %c0_32, %c0_33] : memref<1x4x8x8xbf16, #tpu.memory_space<vmem>>, vector<1x1x8x8xbf16>
    %72 = vector.shape_cast %71 : vector<1x1x8x8xbf16> to vector<8x8xbf16>
    %73 = arith.extf %72 : vector<8x8xbf16> to vector<8x8xf32>
    %74 = arith.addf %70, %73 : vector<8x8xf32>
    %75 = arith.addf %74, %22 : vector<8x8xf32>
    %cst_34 = arith.constant dense<0xFF800000> : vector<8xf32>
    %76 = vector.multi_reduction <maximumf>, %75, %cst_34 [1] : vector<8x8xf32> to vector<8xf32>
    %77 = vector.shape_cast %76 : vector<8xf32> to vector<8x1xf32>
    %78 = vector.broadcast %77 : vector<8x1xf32> to vector<8x8xf32>
    %79 = arith.subf %75, %78 : vector<8x8xf32>
    %80 = math.exp %79 : vector<8x8xf32>
    %cst_35 = arith.constant dense<0.000000e+00> : vector<8xf32>
    %81 = vector.multi_reduction <add>, %80, %cst_35 [1] : vector<8x8xf32> to vector<8xf32>
    %82 = vector.shape_cast %81 : vector<8xf32> to vector<8x1xf32>
    %83 = tpu.reciprocal %82 {approx = true} : vector<8x1xf32> -> vector<8x1xf32>
    %84 = vector.broadcast %83 : vector<8x1xf32> to vector<8x8xf32>
    %85 = arith.mulf %80, %84 : vector<8x8xf32>
    %86 = arith.truncf %85 : vector<8x8xf32> to vector<8x8xbf16>
    %cst_36 = arith.constant dense<0.000000e+00> : vector<8x8xf32>
    %87 = tpu.matmul %86, %69, %cst_36 {dimension_numbers = #tpu.dot_dimension_numbers<[1], [0], [0], [1], [0, 0, 1, 1], [], []>} : vector<8x8xbf16>, vector<8x8xbf16>, vector<8x8xf32> -> vector<8x8xf32>
    %c0_37 = arith.constant 0 : index
    %c16 = arith.constant 16 : index
    %88 = vector.load %arg11[%c0_37, %c16] : memref<8x32xf32, #tpu.memory_space<vmem>>, vector<8x8xf32>
    tpu.vector_store %arg11[%c0_37, %c16], %87 {strides = array<i32>} : memref<8x32xf32, #tpu.memory_space<vmem>>, vector<8x8xf32>,
    %89 = vector.extract_strided_slice %18 {offsets = [0, 24], sizes = [8, 8], strides = [1, 1]} : vector<8x96xbf16> to vector<8x8xbf16>
    %90 = vector.extract_strided_slice %18 {offsets = [0, 56], sizes = [8, 8], strides = [1, 1]} : vector<8x96xbf16> to vector<8x8xbf16>
    %91 = vector.extract_strided_slice %18 {offsets = [0, 88], sizes = [8, 8], strides = [1, 1]} : vector<8x96xbf16> to vector<8x8xbf16>
    %cst_38 = arith.constant dense<0.000000e+00> : vector<8x8xf32>
    %92 = tpu.matmul %89, %90, %cst_38 {dimension_numbers = #tpu.dot_dimension_numbers<[1], [1], [0], [0], [0, 0, 1, 0], [], []>} : vector<8x8xbf16>, vector<8x8xbf16>, vector<8x8xf32> -> vector<8x8xf32>
    %c0_39 = arith.constant 0 : index
    %c3 = arith.constant 3 : index
    %c0_40 = arith.constant 0 : index
    %c0_41 = arith.constant 0 : index
    %93 = vector.load %arg5[%c0_39, %c3, %c0_40, %c0_41] : memref<1x4x8x8xbf16, #tpu.memory_space<vmem>>, vector<1x1x8x8xbf16>
    %94 = vector.shape_cast %93 : vector<1x1x8x8xbf16> to vector<8x8xbf16>
    %95 = arith.extf %94 : vector<8x8xbf16> to vector<8x8xf32>
    %96 = arith.addf %92, %95 : vector<8x8xf32>
    %97 = arith.addf %96, %22 : vector<8x8xf32>
    %cst_42 = arith.constant dense<0xFF800000> : vector<8xf32>
    %98 = vector.multi_reduction <maximumf>, %97, %cst_42 [1] : vector<8x8xf32> to vector<8xf32>
    %99 = vector.shape_cast %98 : vector<8xf32> to vector<8x1xf32>
    %100 = vector.broadcast %99 : vector<8x1xf32> to vector<8x8xf32>
    %101 = arith.subf %97, %100 : vector<8x8xf32>
    %102 = math.exp %101 : vector<8x8xf32>
    %cst_43 = arith.constant dense<0.000000e+00> : vector<8xf32>
    %103 = vector.multi_reduction <add>, %102, %cst_43 [1] : vector<8x8xf32> to vector<8xf32>
    %104 = vector.shape_cast %103 : vector<8xf32> to vector<8x1xf32>
    %105 = tpu.reciprocal %104 {approx = true} : vector<8x1xf32> -> vector<8x1xf32>
    %106 = vector.broadcast %105 : vector<8x1xf32> to vector<8x8xf32>
    %107 = arith.mulf %102, %106 : vector<8x8xf32>
    %108 = arith.truncf %107 : vector<8x8xf32> to vector<8x8xbf16>
    %cst_44 = arith.constant dense<0.000000e+00> : vector<8x8xf32>
    %109 = tpu.matmul %108, %91, %cst_44 {dimension_numbers = #tpu.dot_dimension_numbers<[1], [0], [0], [1], [0, 0, 1, 1], [], []>} : vector<8x8xbf16>, vector<8x8xbf16>, vector<8x8xf32> -> vector<8x8xf32>
    %c0_45 = arith.constant 0 : index
    %c24 = arith.constant 24 : index
    %110 = vector.load %arg11[%c0_45, %c24] : memref<8x32xf32, #tpu.memory_space<vmem>>, vector<8x8xf32>
    tpu.vector_store %arg11[%c0_45, %c24], %109 {strides = array<i32>} : memref<8x32xf32, #tpu.memory_space<vmem>>, vector<8x8xf32>,
    %c0_46 = arith.constant 0 : index
    %c0_47 = arith.constant 0 : index
    %111 = vector.load %arg11[%c0_46, %c0_47] : memref<8x32xf32, #tpu.memory_space<vmem>>, vector<8x32xf32>
    %112 = arith.truncf %111 : vector<8x32xf32> to vector<8x32xbf16>
    %c0_48 = arith.constant 0 : index
    %c0_49 = arith.constant 0 : index
    %113 = vector.load %arg4[%c0_48, %c0_49] : memref<32x32xbf16, #tpu.memory_space<vmem>>, vector<32x32xbf16>
    %cst_50 = arith.constant dense<0.000000e+00> : vector<8x32xf32>
    %114 = tpu.matmul %112, %113, %cst_50 {dimension_numbers = #tpu.dot_dimension_numbers<[1], [0], [0], [1], [0, 0, 1, 1], [], []>} : vector<8x32xbf16>, vector<32x32xbf16>, vector<8x32xf32> -> vector<8x32xf32>
    %115 = arith.addf %1, %114 : vector<8x32xf32>
    %116 = arith.mulf %115, %115 : vector<8x32xf32>
    %cst_51 = arith.constant dense<0.000000e+00> : vector<8xf32>
    %117 = vector.multi_reduction <add>, %116, %cst_51 [1] : vector<8x32xf32> to vector<8xf32>
    %118 = vector.shape_cast %117 : vector<8xf32> to vector<8x1xf32>
    %cst_52 = arith.constant 3.200000e+01 : f32
    %119 = vector.broadcast %cst_52 : f32 to vector<8x1xf32>
    %120 = arith.divf %118, %119 : vector<8x1xf32>
    %cst_53 = arith.constant 9.99999997E-7 : f32
    %121 = vector.broadcast %cst_53 : f32 to vector<8x1xf32>
    %122 = arith.addf %120, %121 : vector<8x1xf32>
    %123 = math.rsqrt %122 : vector<8x1xf32>
    %124 = vector.broadcast %123 : vector<8x1xf32> to vector<8x32xf32>
    %125 = arith.mulf %115, %124 : vector<8x32xf32>
    %c0_54 = arith.constant 0 : index
    %c0_55 = arith.constant 0 : index
    %126 = vector.load %arg7[%c0_54, %c0_55] : memref<1x32xf32, #tpu.memory_space<vmem>>, vector<1x32xf32>
    %127 = vector.broadcast %126 : vector<1x32xf32> to vector<8x32xf32>
    %128 = arith.mulf %125, %127 : vector<8x32xf32>
    %129 = arith.truncf %128 : vector<8x32xf32> to vector<8x32xbf16>
    %c0_56 = arith.constant 0 : index
    %c0_57 = arith.constant 0 : index
    %130 = vector.load %arg8[%c0_56, %c0_57] : memref<32x128xbf16, #tpu.memory_space<vmem>>, vector<32x128xbf16>
    %cst_58 = arith.constant dense<0.000000e+00> : vector<8x128xf32>
    %131 = tpu.matmul %129, %130, %cst_58 {dimension_numbers = #tpu.dot_dimension_numbers<[1], [0], [0], [1], [0, 0, 1, 1], [], []>} : vector<8x32xbf16>, vector<32x128xbf16>, vector<8x128xf32> -> vector<8x128xf32>
    %132 = vector.extract_strided_slice %131 {offsets = [0, 0], sizes = [8, 64], strides = [1, 1]} : vector<8x128xf32> to vector<8x64xf32>
    %133 = vector.extract_strided_slice %131 {offsets = [0, 64], sizes = [8, 64], strides = [1, 1]} : vector<8x128xf32> to vector<8x64xf32>
    %cst_59 = arith.constant 5.000000e-01 : f32
    %134 = vector.broadcast %cst_59 : f32 to vector<8x64xf32>
    %135 = arith.mulf %134, %132 : vector<8x64xf32>
    %cst_60 = arith.constant 4.471500e-02 : f32
    %136 = vector.broadcast %cst_60 : f32 to vector<8x64xf32>
    %137 = arith.mulf %136, %132 : vector<8x64xf32>
    %138 = arith.mulf %137, %132 : vector<8x64xf32>
    %139 = arith.mulf %138, %132 : vector<8x64xf32>
    %140 = arith.addf %132, %139 : vector<8x64xf32>
    %cst_61 = arith.constant 0.797884583 : f32
    %141 = vector.broadcast %cst_61 : f32 to vector<8x64xf32>
    %142 = arith.mulf %141, %140 : vector<8x64xf32>
    %143 = math.tanh %142 : vector<8x64xf32>
    %cst_62 = arith.constant 1.000000e+00 : f32
    %144 = vector.broadcast %cst_62 : f32 to vector<8x64xf32>
    %145 = arith.addf %144, %143 : vector<8x64xf32>
    %146 = arith.mulf %135, %145 : vector<8x64xf32>
    %147 = arith.mulf %146, %133 : vector<8x64xf32>
    %148 = arith.truncf %147 : vector<8x64xf32> to vector<8x64xbf16>
    %c0_63 = arith.constant 0 : index
    %c0_64 = arith.constant 0 : index
    %149 = vector.load %arg9[%c0_63, %c0_64] : memref<64x32xbf16, #tpu.memory_space<vmem>>, vector<64x32xbf16>
    %cst_65 = arith.constant dense<0.000000e+00> : vector<8x32xf32>
    %150 = tpu.matmul %148, %149, %cst_65 {dimension_numbers = #tpu.dot_dimension_numbers<[1], [0], [0], [1], [0, 0, 1, 1], [], []>} : vector<8x64xbf16>, vector<64x32xbf16>, vector<8x32xf32> -> vector<8x32xf32>
    %151 = arith.addf %115, %150 : vector<8x32xf32>
    %c0_66 = arith.constant 0 : index
    %c0_67 = arith.constant 0 : index
    %c0_68 = arith.constant 0 : index
    %152 = vector.load %arg10[%c0_66, %c0_67, %c0_68] : memref<1x8x32xf32, #tpu.memory_space<vmem>>, vector<1x8x32xf32>
    %153 = vector.shape_cast %152 : vector<1x8x32xf32> to vector<8x32xf32>
    %154 = vector.shape_cast %151 : vector<8x32xf32> to vector<1x8x32xf32>
    tpu.vector_store %arg10[%c0_66, %c0_67, %c0_68], %154 {strides = array<i32>} : memref<1x8x32xf32, #tpu.memory_space<vmem>>, vector<1x8x32xf32>,
    return
  }
  func.func @transform_0(%arg0: i32) -> (i32, i32, i32) {
    %c0_i32 = arith.constant 0 : i32
    %c0_i32_0 = arith.constant 0 : i32
    %c0_i32_1 = arith.constant 0 : i32
    return %arg0, %c0_i32, %c0_i32_0 : i32, i32, i32
  }
  func.func @transform_1(%arg0: i32) -> (i32, i32) {
    %c0_i32 = arith.constant 0 : i32
    %c0_i32_0 = arith.constant 0 : i32
    %c0_i32_1 = arith.constant 0 : i32
    return %c0_i32, %c0_i32_0 : i32, i32
  }
  func.func @transform_2(%arg0: i32) -> (i32, i32) {
    %c0_i32 = arith.constant 0 : i32
    %c0_i32_0 = arith.constant 0 : i32
    %c0_i32_1 = arith.constant 0 : i32
    return %c0_i32, %c0_i32_0 : i32, i32
  }
  func.func @transform_3(%arg0: i32) -> (i32, i32) {
    %c0_i32 = arith.constant 0 : i32
    %c0_i32_0 = arith.constant 0 : i32
    %c0_i32_1 = arith.constant 0 : i32
    return %c0_i32, %c0_i32_0 : i32, i32
  }
  func.func @transform_4(%arg0: i32) -> (i32, i32, i32, i32) {
    %c0_i32 = arith.constant 0 : i32
    %c0_i32_0 = arith.constant 0 : i32
    %c0_i32_1 = arith.constant 0 : i32
    %c0_i32_2 = arith.constant 0 : i32
    %c0_i32_3 = arith.constant 0 : i32
    return %c0_i32, %c0_i32_0, %c0_i32_1, %c0_i32_2 : i32, i32, i32, i32
  }
  func.func @transform_5(%arg0: i32) -> (i32, i32, i32) {
    %c0_i32 = arith.constant 0 : i32
    %c0_i32_0 = arith.constant 0 : i32
    %c0_i32_1 = arith.constant 0 : i32
    return %arg0, %c0_i32, %c0_i32_0 : i32, i32, i32
  }
  func.func @transform_6(%arg0: i32) -> (i32, i32) {
    %c0_i32 = arith.constant 0 : i32
    %c0_i32_0 = arith.constant 0 : i32
    %c0_i32_1 = arith.constant 0 : i32
    return %c0_i32, %c0_i32_0 : i32, i32
  }
  func.func @transform_7(%arg0: i32) -> (i32, i32) {
    %c0_i32 = arith.constant 0 : i32
    %c0_i32_0 = arith.constant 0 : i32
    %c0_i32_1 = arith.constant 0 : i32
    return %c0_i32, %c0_i32_0 : i32, i32
  }
  func.func @transform_8(%arg0: i32) -> (i32, i32) {
    %c0_i32 = arith.constant 0 : i32
    %c0_i32_0 = arith.constant 0 : i32
    %c0_i32_1 = arith.constant 0 : i32
    return %c0_i32, %c0_i32_0 : i32, i32
  }
  func.func @transform_9(%arg0: i32) -> (i32, i32, i32) {
    %c0_i32 = arith.constant 0 : i32
    %c0_i32_0 = arith.constant 0 : i32
    %c0_i32_1 = arith.constant 0 : i32
    return %arg0, %c0_i32, %c0_i32_0 : i32, i32, i32
  }
}

</mosaic_0001>

<llo_original>
// kernel: tpu_custom_call.1
$region0: #{tpu_custom_call.1}
  #allocation0 [shape = 'u32[]', space=smem, size = 0x4, offset = 0x4, fixed_abs, tag = 'smem constant byte address 0x4 - core index']
  #allocation1 [shape = 'u32[72,128]{1,0:T(1,128)}', space=vmem, size = 0x9000, scoped, tag = 'internal scratch']
  #allocation2 [shape = 'f32[8,32]{1,0:T(8,128)}', space=vmem, size = 0x1000, scoped, tag = 'scratch operand']
  %s0 = inlined_call_operand.vmem [shape: f32[2,8,32], index: 0, kind: input, shape index: {}]
  %s1 = inlined_call_operand.hbm [shape: f32[1,32], index: 1, kind: input, shape index: {}]
  %s2 = inlined_call_operand.vmem [shape: bf16[32,96], index: 2, kind: input, shape index: {}]
  %s3 = inlined_call_operand.vmem [shape: bf16[32,32], index: 3, kind: input, shape index: {}]
  %s4 = inlined_call_operand.hbm [shape: bf16[1,4,8,8], index: 4, kind: input, shape index: {}]
  %s5 = inlined_call_operand.vmem [shape: f32[2,1,8], index: 5, kind: input, shape index: {}]
  %s6 = inlined_call_operand.vmem [shape: f32[1,32], index: 6, kind: input, shape index: {}]
  %s7 = inlined_call_operand.hbm [shape: bf16[32,128], index: 7, kind: input, shape index: {}]
  %s8 = inlined_call_operand.vmem [shape: bf16[64,32], index: 8, kind: input, shape index: {}]
  %s9 = inlined_call_operand.hbm [shape: f32[2,8,32], index: 9, kind: output, shape index: {}]
  %s10 = sld [smem:[#allocation0]]
  $region81: #{tpu_custom_call.1} parent=0
    _
  %s12 = ssub.s32 1, %s10
  %s13 = scalar_select 0, %s12, %s10
  $region1: #{tpu_custom_call.1} parent=0
    #allocation3 [shape = 'u8[512]{0}', space=vmem, size = 0x400, scoped, tag = 'input window, operand 1, single buffered']
    #allocation4 [shape = 's32[2]{0}', space=sflag, size = 0x8, scoped, tag = 'scoped memory for tpu_custom_call.1']
    #allocation5 [shape = 's32[2]{0}', space=sflag, size = 0x8, scoped, tag = 'scoped memory for tpu_custom_call.1']
    #allocation6 [shape = 'u8[8192]{0}', space=vmem, size = 0x2000, scoped, tag = 'input window, operand 4, single buffered']
    #allocation7 [shape = 's32[1]{0}', space=sflag, size = 0x4, scoped, tag = 'scoped memory for tpu_custom_call.1']
    #allocation8 [shape = 'u8[8192]{0}', space=vmem, size = 0x2000, scoped, tag = 'input window, operand 7, single buffered']
    #allocation9 [shape = 'u8[8192]{0}', space=vmem, size = 0x2000, scoped, tag = 'output window, operand 0']
    %14 = vsyncpa [#allocation4], 0
    %15 = vsyncpa [#allocation7], 0
    %16 = vsyncpa [#allocation5], 0
    %s17 = scalar_lea.sflag [#allocation5], 1
    %18 = vsyncpa %s17, 0
    loop: start=0, step=1, limit=4
    $region2: #{tpu_custom_call.1} parent=1 // loop_pre_header
      _
    $region3: #{tpu_custom_call.1} parent=1 // loop_header
      %s20 = sphi 0, %s24
      %p21 = scmp.ge.s32.totalorder %s20, 4
      %s30 = sphi 0, %s32
      %s33 = sphi 0, %s30
      %s34 = sphi 0, %s33
      %s50 = sphi 0, %s34
      %s54 = sphi 0, %s54
      %s56 = sphi 0, %s54
      %s57 = sphi 0, %s56
      %s71 = sphi 0, %s57
      %s75 = sphi 0, %s75
      %s77 = sphi 0, %s75
      %s78 = sphi 0, %s77
      %s92 = sphi 0, %s78
      %s96 = sphi 0, %s96
      %s98 = sphi 0, %s96
      %s99 = sphi 0, %s98
      %s113 = sphi 0, %s99
      %s117 = sphi 0, %s117
      %s119 = sphi 0, %s117
      %s120 = sphi 0, %s119
      %s134 = sphi 0, %s120
      %s140 = sphi 0, %s142
      %s143 = sphi 0, %s140
      %s144 = sphi 0, %s143
      %s160 = sphi 0, %s144
      %s164 = sphi 0, %s164
      %s166 = sphi 0, %s164
      %s167 = sphi 0, %s166
      %s181 = sphi 0, %s167
      %s185 = sphi 0, %s185
      %s187 = sphi 0, %s185
      %s188 = sphi 0, %s187
      %s202 = sphi 0, %s188
      %s206 = sphi 0, %s206
      %s208 = sphi 0, %s206
      %s209 = sphi 0, %s208
      %s223 = sphi 0, %s209
      %s229 = sphi 0, %s231
      %s232 = sphi 0, %s229
      %s233 = sphi 0, %s232
      %s249 = sphi 0, %s233
    $region4: #{tpu_custom_call.1} parent=1 // loop_header_branch
      %23 = sbr.rel (%p21) target = $region8
    $region5: #{tpu_custom_call.1} parent=1 // loop_body
      %s25 = ssub.s32 %s20, 1
      %s26 = ssub.s32 %s20, 2
      %s27 = sadd.s32 %s20, 1
      %s28 = ssub.s32 %s20, %s27
      %p29 = scmp.eq.s32.totalorder %s28, 0
      %s31 = sadd.s32 %s30, 1
      %s32 = scalar_select %p29, %s30, %s31
      %p35 = pneg %p29
      %p36 = scmp.eq.s32.totalorder %s20, 1
      %p37 = por %p35, %p36
      %p38 = scmp.ne.s32.totalorder %s30, %s33
      %p39 = scmp.eq.s32.totalorder %s20, 0
      %p40 = por %p38, %p39
      %p41 = scmp.ne.s32.totalorder %s30, %s33
      %p42 = scmp.eq.s32.totalorder %s25, 1
      %p43 = por %p41, %p42
      %p44 = scmp.ne.s32.totalorder %s33, %s34
      %p45 = scmp.eq.s32.totalorder %s25, 0
      %p46 = por %p44, %p45
      %p47 = scmp.ne.s32.totalorder %s33, %s34
      %p48 = scmp.eq.s32.totalorder %s26, 1
      %p49 = por %p47, %p48
      %p51 = scmp.ne.s32.totalorder %s34, %s50
      %p52 = scmp.eq.s32.totalorder %s26, 0
      %p53 = por %p51, %p52
      %s55 = sadd.s32 %s54, 1
      %p58 = scmp.eq.s32.totalorder %s20, 1
      %p59 = scmp.ne.s32.totalorder %s54, %s56
      %p60 = scmp.eq.s32.totalorder %s20, 0
      %p61 = por %p59, %p60
      %p62 = scmp.ne.s32.totalorder %s54, %s56
      %p63 = scmp.eq.s32.totalorder %s25, 1
      %p64 = por %p62, %p63
      %p65 = scmp.ne.s32.totalorder %s56, %s57
      %p66 = scmp.eq.s32.totalorder %s25, 0
      %p67 = por %p65, %p66
      %p68 = scmp.ne.s32.totalorder %s56, %s57
      %p69 = scmp.eq.s32.totalorder %s26, 1
      %p70 = por %p68, %p69
      %p72 = scmp.ne.s32.totalorder %s57, %s71
      %p73 = scmp.eq.s32.totalorder %s26, 0
      %p74 = por %p72, %p73
      %s76 = sadd.s32 %s75, 1
      %p79 = scmp.eq.s32.totalorder %s20, 1
      %p80 = scmp.ne.s32.totalorder %s75, %s77
      %p81 = scmp.eq.s32.totalorder %s20, 0
      %p82 = por %p80, %p81
      %p83 = scmp.ne.s32.totalorder %s75, %s77
      %p84 = scmp.eq.s32.totalorder %s25, 1
      %p85 = por %p83, %p84
      %p86 = scmp.ne.s32.totalorder %s77, %s78
      %p87 = scmp.eq.s32.totalorder %s25, 0
      %p88 = por %p86, %p87
      %p89 = scmp.ne.s32.totalorder %s77, %s78
      %p90 = scmp.eq.s32.totalorder %s26, 1
      %p91 = por %p89, %p90
      %p93 = scmp.ne.s32.totalorder %s78, %s92
      %p94 = scmp.eq.s32.totalorder %s26, 0
      %p95 = por %p93, %p94
      %s97 = sadd.s32 %s96, 1
      %p100 = scmp.eq.s32.totalorder %s20, 1
      %p101 = scmp.ne.s32.totalorder %s96, %s98
      %p102 = scmp.eq.s32.totalorder %s20, 0
      %p103 = por %p101, %p102
      %p104 = scmp.ne.s32.totalorder %s96, %s98
      %p105 = scmp.eq.s32.totalorder %s25, 1
      %p106 = por %p104, %p105
      %p107 = scmp.ne.s32.totalorder %s98, %s99
      %p108 = scmp.eq.s32.totalorder %s25, 0
      %p109 = por %p107, %p108
      %p110 = scmp.ne.s32.totalorder %s98, %s99
      %p111 = scmp.eq.s32.totalorder %s26, 1
      %p112 = por %p110, %p111
      %p114 = scmp.ne.s32.totalorder %s99, %s113
      %p115 = scmp.eq.s32.totalorder %s26, 0
      %p116 = por %p114, %p115
      %s118 = sadd.s32 %s117, 1
      %p121 = scmp.eq.s32.totalorder %s20, 1
      %p122 = scmp.ne.s32.totalorder %s117, %s119
      %p123 = scmp.eq.s32.totalorder %s20, 0
      %p124 = por %p122, %p123
      %p125 = scmp.ne.s32.totalorder %s117, %s119
      %p126 = scmp.eq.s32.totalorder %s25, 1
      %p127 = por %p125, %p126
      %p128 = scmp.ne.s32.totalorder %s119, %s120
      %p129 = scmp.eq.s32.totalorder %s25, 0
      %p130 = por %p128, %p129
      %p131 = scmp.ne.s32.totalorder %s119, %s120
      %p132 = scmp.eq.s32.totalorder %s26, 1
      %p133 = por %p131, %p132
      %p135 = scmp.ne.s32.totalorder %s120, %s134
      %p136 = scmp.eq.s32.totalorder %s26, 0
      %p137 = por %p135, %p136
      %s138 = ssub.s32 %s20, %s27
      %p139 = scmp.eq.s32.totalorder %s138, 0
      %s141 = sadd.s32 %s140, 1
      %s142 = scalar_select %p139, %s140, %s141
      %p145 = pneg %p139
      %p146 = scmp.eq.s32.totalorder %s20, 1
      %p147 = por %p145, %p146
      %p148 = scmp.ne.s32.totalorder %s140, %s143
      %p149 = scmp.eq.s32.totalorder %s20, 0
      %p150 = por %p148, %p149
      %p151 = scmp.ne.s32.totalorder %s140, %s143
      %p152 = scmp.eq.s32.totalorder %s25, 1
      %p153 = por %p151, %p152
      %p154 = scmp.ne.s32.totalorder %s143, %s144
      %p155 = scmp.eq.s32.totalorder %s25, 0
      %p156 = por %p154, %p155
      %p157 = scmp.ne.s32.totalorder %s143, %s144
      %p158 = scmp.eq.s32.totalorder %s26, 1
      %p159 = por %p157, %p158
      %p161 = scmp.ne.s32.totalorder %s144, %s160
      %p162 = scmp.eq.s32.totalorder %s26, 0
      %p163 = por %p161, %p162
      %s165 = sadd.s32 %s164, 1
      %p168 = scmp.eq.s32.totalorder %s20, 1
      %p169 = scmp.ne.s32.totalorder %s164, %s166
      %p170 = scmp.eq.s32.totalorder %s20, 0
      %p171 = por %p169, %p170
      %p172 = scmp.ne.s32.totalorder %s164, %s166
      %p173 = scmp.eq.s32.totalorder %s25, 1
      %p174 = por %p172, %p173
      %p175 = scmp.ne.s32.totalorder %s166, %s167
      %p176 = scmp.eq.s32.totalorder %s25, 0
      %p177 = por %p175, %p176
      %p178 = scmp.ne.s32.totalorder %s166, %s167
      %p179 = scmp.eq.s32.totalorder %s26, 1
      %p180 = por %p178, %p179
      %p182 = scmp.ne.s32.totalorder %s167, %s181
      %p183 = scmp.eq.s32.totalorder %s26, 0
      %p184 = por %p182, %p183
      %s186 = sadd.s32 %s185, 1
      %p189 = scmp.eq.s32.totalorder %s20, 1
      %p190 = scmp.ne.s32.totalorder %s185, %s187
      %p191 = scmp.eq.s32.totalorder %s20, 0
      %p192 = por %p190, %p191
      %p193 = scmp.ne.s32.totalorder %s185, %s187
      %p194 = scmp.eq.s32.totalorder %s25, 1
      %p195 = por %p193, %p194
      %p196 = scmp.ne.s32.totalorder %s187, %s188
      %p197 = scmp.eq.s32.totalorder %s25, 0
      %p198 = por %p196, %p197
      %p199 = scmp.ne.s32.totalorder %s187, %s188
      %p200 = scmp.eq.s32.totalorder %s26, 1
      %p201 = por %p199, %p200
      %p203 = scmp.ne.s32.totalorder %s188, %s202
      %p204 = scmp.eq.s32.totalorder %s26, 0
      %p205 = por %p203, %p204
      %s207 = sadd.s32 %s206, 1
      %p210 = scmp.eq.s32.totalorder %s20, 1
      %p211 = scmp.ne.s32.totalorder %s206, %s208
      %p212 = scmp.eq.s32.totalorder %s20, 0
      %p213 = por %p211, %p212
      %p214 = scmp.ne.s32.totalorder %s206, %s208
      %p215 = scmp.eq.s32.totalorder %s25, 1
      %p216 = por %p214, %p215
      %p217 = scmp.ne.s32.totalorder %s208, %s209
      %p218 = scmp.eq.s32.totalorder %s25, 0
      %p219 = por %p217, %p218
      %p220 = scmp.ne.s32.totalorder %s208, %s209
      %p221 = scmp.eq.s32.totalorder %s26, 1
      %p222 = por %p220, %p221
      %p224 = scmp.ne.s32.totalorder %s209, %s223
      %p225 = scmp.eq.s32.totalorder %s26, 0
      %p226 = por %p224, %p225
      %s227 = ssub.s32 %s20, %s27
      %p228 = scmp.eq.s32.totalorder %s227, 0
      %s230 = sadd.s32 %s229, 1
      %s231 = scalar_select %p228, %s229, %s230
      %p234 = pneg %p228
      %p235 = scmp.eq.s32.totalorder %s20, 1
      %p236 = por %p234, %p235
      %p237 = scmp.ne.s32.totalorder %s229, %s232
      %p238 = scmp.eq.s32.totalorder %s20, 0
      %p239 = por %p237, %p238
      %p240 = scmp.ne.s32.totalorder %s229, %s232
      %p241 = scmp.eq.s32.totalorder %s25, 1
      %p242 = por %p240, %p241
      %p243 = scmp.ne.s32.totalorder %s232, %s233
      %p244 = scmp.eq.s32.totalorder %s25, 0
      %p245 = por %p243, %p244
      %p246 = scmp.ne.s32.totalorder %s232, %s233
      %p247 = scmp.eq.s32.totalorder %s26, 1
      %p248 = por %p246, %p247
      %p250 = scmp.ne.s32.totalorder %s233, %s249
      %p251 = scmp.eq.s32.totalorder %s26, 0
      %p252 = por %p250, %p251
      %p253 = scmp.le.s32.totalorder 1, %s20
      %p254 = scmp.lt.s32.totalorder %s20, 3
      %p255 = pnand %p253, %p254
      %p256 = pneg %p255
      // Predicated region
      $region9: #{tpu_custom_call.1} parent=5 // pred_check
        _
      $region10: #{tpu_custom_call.1} parent=5 // pred_check_branch
        %258 = sbr.rel (%p255) target = $region12
      $region11: #{tpu_custom_call.1} parent=5 // pred_region
        %s259 = ssub.s32 %s20, 1
        // Predicated region
        $region13: #{tpu_custom_call.1} parent=11 // pred_check
          %p260 = pneg %p67
        $region14: #{tpu_custom_call.1} parent=11 // pred_check_branch
          %262 = sbr.rel (%p260) target = $region16
        $region15: #{tpu_custom_call.1} parent=11 // pred_region
          %264 = vsyncadd [#allocation4], 0
          %s266 = sshll.u32 %s1, 4
          %s267 = int_to_ptr.hbm [resolvable:$true] %s266
          %s268 = sshll.u32 [#allocation3], 4
          %s269 = int_to_ptr.vmem [resolvable:$true] %s268
          %271 = dma.hbm_to_vmem [thread:$0]  %s267, 16, %s269, [#allocation4]
        $region16: #{tpu_custom_call.1} parent=11 // pred_fallthru
          _
        // Predicated region
        $region17: #{tpu_custom_call.1} parent=11 // pred_check
          %p272 = pneg %p88
        $region18: #{tpu_custom_call.1} parent=11 // pred_check_branch
          %274 = sbr.rel (%p272) target = $region20
        $region19: #{tpu_custom_call.1} parent=11 // pred_region
          _
        $region20: #{tpu_custom_call.1} parent=11 // pred_fallthru
          _
        // Predicated region
        $region21: #{tpu_custom_call.1} parent=11 // pred_check
          %p275 = pneg %p109
        $region22: #{tpu_custom_call.1} parent=11 // pred_check_branch
          %277 = sbr.rel (%p275) target = $region24
        $region23: #{tpu_custom_call.1} parent=11 // pred_region
          _
        $region24: #{tpu_custom_call.1} parent=11 // pred_fallthru
          _
        // Predicated region
        $region25: #{tpu_custom_call.1} parent=11 // pred_check
          %p278 = pneg %p130
        $region26: #{tpu_custom_call.1} parent=11 // pred_check_branch
          %280 = sbr.rel (%p278) target = $region28
        $region27: #{tpu_custom_call.1} parent=11 // pred_region
          %282 = vsyncadd [#allocation7], 0
          %s283 = sshll.u32 %s4, 4
          %s284 = int_to_ptr.hbm [resolvable:$true] %s283
          %s285 = sshll.u32 [#allocation6], 4
          %s286 = int_to_ptr.vmem [resolvable:$true] %s285
          %291 = dma.hbm_to_vmem [thread:$0]  %s284, 256, %s286, [#allocation7], 64, 64, 4
        $region28: #{tpu_custom_call.1} parent=11 // pred_fallthru
          _
        // Predicated region
        $region29: #{tpu_custom_call.1} parent=11 // pred_check
          %p292 = pneg %p177
        $region30: #{tpu_custom_call.1} parent=11 // pred_check_branch
          %294 = sbr.rel (%p292) target = $region32
        $region31: #{tpu_custom_call.1} parent=11 // pred_region
          _
        $region32: #{tpu_custom_call.1} parent=11 // pred_fallthru
          _
        // Predicated region
        $region33: #{tpu_custom_call.1} parent=11 // pred_check
          %p295 = pneg %p198
        $region34: #{tpu_custom_call.1} parent=11 // pred_check_branch
          %297 = sbr.rel (%p295) target = $region36
        $region35: #{tpu_custom_call.1} parent=11 // pred_region
          %299 = vsyncadd [#allocation7], 0
          %s300 = sshll.u32 %s7, 4
          %s301 = int_to_ptr.hbm [resolvable:$true] %s300
          %s302 = sshll.u32 [#allocation8], 4
          %s303 = int_to_ptr.vmem [resolvable:$true] %s302
          %308 = dma.hbm_to_vmem [thread:$0]  %s301, 256, %s303, [#allocation7], 64, 64, 4
        $region36: #{tpu_custom_call.1} parent=11 // pred_fallthru
          _
        // Predicated region
        $region37: #{tpu_custom_call.1} parent=11 // pred_check
          %p309 = pneg %p219
        $region38: #{tpu_custom_call.1} parent=11 // pred_check_branch
          %311 = sbr.rel (%p309) target = $region40
        $region39: #{tpu_custom_call.1} parent=11 // pred_region
          _
        $region40: #{tpu_custom_call.1} parent=11 // pred_fallthru
          _
      $region12: #{tpu_custom_call.1} parent=5 // pred_fallthru
        _
      %p312 = scmp.lt.s32.totalorder %s20, 2
      // Predicated region
      $region41: #{tpu_custom_call.1} parent=5 // pred_check
        %p313 = pneg %p312
      $region42: #{tpu_custom_call.1} parent=5 // pred_check_branch
        %315 = sbr.rel (%p313) target = $region44
      $region43: #{tpu_custom_call.1} parent=5 // pred_region
        // Predicated region
        $region45: #{tpu_custom_call.1} parent=43 // pred_check
          %p316 = pneg %p40
        $region46: #{tpu_custom_call.1} parent=43 // pred_check_branch
          %318 = sbr.rel (%p316) target = $region48
        $region47: #{tpu_custom_call.1} parent=43 // pred_region
          %p319 = scmp.lt.s32.totalorder %s20, 1
          %s320 = scalar_select %p319, %s20, 1
          %s321 = smul.addr %s320, 8
          %s322 = scalar_lea.vmem %s0, %s321
        $region48: #{tpu_custom_call.1} parent=43 // pred_fallthru
          _
        // Predicated region
        $region49: #{tpu_custom_call.1} parent=43 // pred_check
          %p323 = pneg %p150
        $region50: #{tpu_custom_call.1} parent=43 // pred_check_branch
          %325 = sbr.rel (%p323) target = $region52
        $region51: #{tpu_custom_call.1} parent=43 // pred_region
          %p326 = scmp.lt.s32.totalorder %s20, 1
          %s327 = scalar_select %p326, %s20, 1
          %s328 = scalar_lea.vmem %s5, %s327
        $region52: #{tpu_custom_call.1} parent=43 // pred_fallthru
          _
      $region44: #{tpu_custom_call.1} parent=5 // pred_fallthru
        _
      %p329 = scmp.le.s32.totalorder 1, %s20
      %p330 = scmp.lt.s32.totalorder %s20, 3
      %p331 = pnand %p329, %p330
      %p332 = pneg %p331
      // Predicated region
      $region53: #{tpu_custom_call.1} parent=5 // pred_check
        _
      $region54: #{tpu_custom_call.1} parent=5 // pred_check_branch
        %334 = sbr.rel (%p331) target = $region56
      $region55: #{tpu_custom_call.1} parent=5 // pred_region
        %s335 = ssub.s32 %s20, 1
        // Predicated region
        $region57: #{tpu_custom_call.1} parent=55 // pred_check
          %p336 = pneg %p67
        $region58: #{tpu_custom_call.1} parent=55 // pred_check_branch
          %338 = sbr.rel (%p336) target = $region60
        $region59: #{tpu_custom_call.1} parent=55 // pred_region
          %340 = dma.done [#allocation4], 16
        $region60: #{tpu_custom_call.1} parent=55 // pred_fallthru
          _
        // Predicated region
        $region61: #{tpu_custom_call.1} parent=55 // pred_check
          %p341 = pneg %p130
        $region62: #{tpu_custom_call.1} parent=55 // pred_check_branch
          %343 = sbr.rel (%p341) target = $region64
        $region63: #{tpu_custom_call.1} parent=55 // pred_region
          %345 = dma.done [#allocation7], 256
        $region64: #{tpu_custom_call.1} parent=55 // pred_fallthru
          _
        // Predicated region
        $region65: #{tpu_custom_call.1} parent=55 // pred_check
          %p346 = pneg %p198
        $region66: #{tpu_custom_call.1} parent=55 // pred_check_branch
          %348 = sbr.rel (%p346) target = $region68
        $region67: #{tpu_custom_call.1} parent=55 // pred_region
          %350 = dma.done [#allocation7], 256
        $region68: #{tpu_custom_call.1} parent=55 // pred_fallthru
          _
        %p351 = scmp.lt.s32.totalorder %s25, 1
        %s352 = scalar_select %p351, %s25, 1
        %s353 = smul.addr %s352, 8
        %s354 = scalar_lea.vmem %s0, %s353
        %p355 = pneg %p46
        %p356 = pneg %p43
        %p357 = pneg %p67
        %p358 = pneg %p64
        %p359 = pneg %p88
        %p360 = pneg %p85
        %p361 = pneg %p109
        %p362 = pneg %p106
        %p363 = pneg %p130
        %p364 = pneg %p127
        %p365 = scmp.lt.s32.totalorder %s25, 1
        %s366 = scalar_select %p365, %s25, 1
        %s367 = scalar_lea.vmem %s5, %s366
        %p368 = pneg %p156
        %p369 = pneg %p153
        %p370 = pneg %p177
        %p371 = pneg %p174
        %p372 = pneg %p198
        %p373 = pneg %p195
        %p374 = pneg %p219
        %p375 = pneg %p216
        %p376 = pneg %p245
        %p377 = pneg %p242
        %s378 = sand.u32 %s232, 1
        %s379 = scalar_lea.sflag [#allocation5], %s378
        %s380 = sand.u32 %s232, 1
        %s381 = smul.addr %s380, 8
        %s382 = scalar_lea.vmem [#allocation9], %s381
        %p383 = scmp.lt.s32.totalorder %s25, 1
        %s384 = scalar_select %p383, %s25, 1
        %s385 = smul.addr %s384, 8
        %s386 = scalar_lea.vmem %s0, %s385
        %p387 = scmp.lt.s32.totalorder %s25, 1
        %s388 = scalar_select %p387, %s25, 1
        %s389 = scalar_lea.vmem %s5, %s388
        %v391 = vld [vmem:[%s386] sm:$0xff]
        %v392 = vmul.f32 %v391, %v391
        %vm393 = vcmask 261120
        %v394 = vsel %vm393, %v392, 0.0
        %395 = vadd.xlane.f32.xlu0 %v394
        %v396 = vpop.xlane.xlu0 %395
        %v397 = vrcp.pop 32.0
        %v398 = vmul.f32 32.0, %v397
        %v399 = vsub.f32 1.0, %v398
        %v400 = vmul.f32 %v397, %v399
        %v401 = vadd.f32 %v397, %v400
        %vm402 = vweird.f32 %v397
        %v403 = vsel %vm402, %v397, %v401
        %v404 = vmul.f32 %v396, %v403
        %v405 = vadd.f32 %v404, 1e-06
        %v406 = vrsqrt.pop %v405
        %v407 = vmul.f32 %v406, %v405
        %v408 = vmul.f32 %v407, %v406
        %v409 = vmul.f32 0.5, %v408
        %v410 = vsub.f32 1.5, %v409
        %v411 = vmul.f32 %v406, %v410
        %vm412 = vweird.f32 %v405
        %vm413 = vweird.f32 %v406
        %vm414 = vmor %vm412, %vm413
        %v415 = vsel %vm414, %v406, %v411
        %v416 = vmul.f32 %v391, %v415
        %v417 = vld [vmem:[#allocation3] sm:$0x1]
        %v419 = vperm.slane %v417, 0
        %v421 = vmul.f32 %v416, %v419
        %v422 = vpack.c.bf16 %v421, %v421
        %v423 = vld [vmem:[%s2] sm:$0xf]
        %v424 = vld [vmem:[%s2 + $0x4] sm:$0xf]
        %v425 = vld [vmem:[%s2 + $0x8] sm:$0xf]
        %v426 = vld [vmem:[%s2 + $0xc] sm:$0xf]
        %v431 = vunpack.c.l.b16 %v423
        %v432 = vunpack.c.l.b16 %v424
        %v433 = vunpack.c.l.b16 %v425
        %v434 = vunpack.c.l.b16 %v426
        %v435 = vpack.c.b16 %v432, %v431
        %v436 = vpack.c.b16 %v434, %v433
        %v440 = vsel %vm393, %v422, 0
        %442 = vmatpush.bf16.msra.mxu0 0
        %443 = vmatpush.bf16.msra.mxu0 0
        %444 = vmatpush.bf16.msra.mxu0 0
        %445 = vmatpush.bf16.msra.mxu0 0
        %446 = vmatpush.bf16.msra.mxu0 0
        %447 = vmatpush.bf16.msra.mxu0 0
        %448 = vmatpush.bf16.msra.mxu0 %v436
        %449 = vmatpush.bf16.msra.mxu0 %v435
        %450 = vmatmul.bf16.gmra.mxu0 %v440
        %v451 = vpop.f32.mrf.mxu0
        %v452 = vadd.f32 0.0, %v451
        %v453 = vpop.f32.mrf.mxu0
        %454 = vdwg.mxu0
        %v455 = vpack.c.bf16 %v452, %v452
        %v456 = vld [vmem:[%s389] sm:$0x1]
        %v458 = vperm.slane %v456, 0
        %v460 = vld [vmem:[#allocation6] sm:$0xf]
        %v461 = vunpack.c.l.bf16 %v460
        %v463 = vunpack.c.l.b16 %v455
        %v464 = vpack.c.b16 %v463, %v463
        %465 = vrot.lane.b32.xlu0 %v464, 96
        %v466 = vpop.permute.xlu0 %465
        %vm467 = vcmask 64512
        %v469 = vsel %vm467, %v455, 0
        %v472 = vsel %vm467, %v466, 0
        %474 = vmatpush.bf16.xpose.msra.mxu0 0
        %475 = vmatpush.bf16.xpose.msra.mxu0 0
        %476 = vmatpush.bf16.xpose.msra.mxu0 0
        %477 = vmatpush.bf16.xpose.msra.mxu0 0
        %478 = vmatpush.bf16.xpose.msra.mxu0 0
        %479 = vmatpush.bf16.xpose.msra.mxu0 0
        %480 = vmatpush.bf16.xpose.msra.mxu0 0
        %481 = vmatpush.bf16.xpose.msra.mxu0 %v472
        %482 = vmatmul.bf16.gmra.mxu0 %v469
        %v483 = vpop.f32.mrf.mxu0
        %v484 = vadd.f32 %v461, %v483
        %v485 = vpop.f32.mrf.mxu0
        %486 = vdwg.mxu0
        %v487 = vadd.f32 %v484, %v458
        %v488 = vsel %vm467, %v487, -inf
        %489 = vmax.xlane.f32.xlu0 %v488
        %v490 = vpop.xlane.xlu0 %489
        %v491 = vsub.f32 %v487, %v490
        %v492 = vmul.f32 %v491, 1.442695
        %v493 = vpow.pop %v492
        %v494 = vsel %vm467, %v493, 0.0
        %495 = vadd.xlane.f32.xlu0 %v494
        %v496 = vpop.xlane.xlu0 %495
        %v497 = vrcp.pop %v496
        %v498 = vmul.f32 %v493, %v497
        %v499 = vpack.c.bf16 %v498, %v498
        %500 = vrot.lane.b32.xlu0 %v464, 64
        %v501 = vpop.permute.xlu0 %500
        %v503 = vsel %vm467, %v499, 0
        %vm505 = vcmask 1043456
        %v507 = vsel %vm505, %v501, 0
        %509 = vmatpush.bf16.msra.mxu0 0
        %510 = vmatpush.bf16.msra.mxu0 0
        %511 = vmatpush.bf16.msra.mxu0 0
        %512 = vmatpush.bf16.msra.mxu0 0
        %513 = vmatpush.bf16.msra.mxu0 0
        %514 = vmatpush.bf16.msra.mxu0 0
        %515 = vmatpush.bf16.msra.mxu0 0
        %516 = vmatpush.bf16.msra.mxu0 %v507
        %517 = vmatmul.bf16.gmra.mxu0 %v503
        %v518 = vpop.f32.mrf.mxu0
        %v519 = vadd.f32 0.0, %v518
        %v520 = vpop.f32.mrf.mxu0
        %521 = vdwg.mxu0
        %522 = vst.msk [vmem:[#allocation2] sm:$0xff] %vm467, %v519
        %s523 = scalar_lea.vmem [#allocation6], 4
        %v524 = vld [vmem:[%s523] sm:$0xf]
        %v525 = vunpack.c.l.bf16 %v524
        %526 = vrot.lane.b32.xlu0 %v464, 120
        %v527 = vpop.permute.xlu0 %526
        %528 = vrot.lane.b32.xlu0 %v464, 88
        %v529 = vpop.permute.xlu0 %528
        %v531 = vsel %vm467, %v527, 0
        %v534 = vsel %vm467, %v529, 0
        %536 = vmatpush.bf16.xpose.msra.mxu0 0
        %537 = vmatpush.bf16.xpose.msra.mxu0 0
        %538 = vmatpush.bf16.xpose.msra.mxu0 0
        %539 = vmatpush.bf16.xpose.msra.mxu0 0
        %540 = vmatpush.bf16.xpose.msra.mxu0 0
        %541 = vmatpush.bf16.xpose.msra.mxu0 0
        %542 = vmatpush.bf16.xpose.msra.mxu0 0
        %543 = vmatpush.bf16.xpose.msra.mxu0 %v534
        %544 = vmatmul.bf16.gmra.mxu0 %v531
        %v545 = vpop.f32.mrf.mxu0
        %v546 = vadd.f32 %v525, %v545
        %v547 = vpop.f32.mrf.mxu0
        %548 = vdwg.mxu0
        %v549 = vadd.f32 %v546, %v458
        %v550 = vsel %vm467, %v549, -inf
        %551 = vmax.xlane.f32.xlu0 %v550
        %v552 = vpop.xlane.xlu0 %551
        %v553 = vsub.f32 %v549, %v552
        %v554 = vmul.f32 %v553, 1.442695
        %v555 = vpow.pop %v554
        %v556 = vsel %vm467, %v555, 0.0
        %557 = vadd.xlane.f32.xlu0 %v556
        %v558 = vpop.xlane.xlu0 %557
        %v559 = vrcp.pop %v558
        %v560 = vmul.f32 %v555, %v559
        %v561 = vpack.c.bf16 %v560, %v560
        %562 = vrot.lane.b32.xlu0 %v464, 56
        %v563 = vpop.permute.xlu0 %562
        %v565 = vsel %vm467, %v561, 0
        %v568 = vsel %vm505, %v563, 0
        %570 = vmatpush.bf16.msra.mxu0 0
        %571 = vmatpush.bf16.msra.mxu0 0
        %572 = vmatpush.bf16.msra.mxu0 0
        %573 = vmatpush.bf16.msra.mxu0 0
        %574 = vmatpush.bf16.msra.mxu0 0
        %575 = vmatpush.bf16.msra.mxu0 0
        %576 = vmatpush.bf16.msra.mxu0 0
        %577 = vmatpush.bf16.msra.mxu0 %v568
        %578 = vmatmul.bf16.gmra.mxu0 %v565
        %v579 = vpop.f32.mrf.mxu0
        %v580 = vadd.f32 0.0, %v579
        %v581 = vpop.f32.mrf.mxu0
        %582 = vdwg.mxu0
        %584 = vrot.lane.b32.xlu0 %v580, 8
        %v585 = vpop.permute.xlu0 %584
        %vm587 = vcmask 130112
        %588 = vst.msk [vmem:[#allocation2] sm:$0xff] %vm587, %v585
        %s589 = scalar_lea.vmem [#allocation6], 8
        %v590 = vld [vmem:[%s589] sm:$0xf]
        %v591 = vunpack.c.l.bf16 %v590
        %592 = vrot.lane.b32.xlu0 %v464, 112
        %v593 = vpop.permute.xlu0 %592
        %594 = vrot.lane.b32.xlu0 %v464, 80
        %v595 = vpop.permute.xlu0 %594
        %v597 = vsel %vm467, %v593, 0
        %v600 = vsel %vm467, %v595, 0
        %602 = vmatpush.bf16.xpose.msra.mxu0 0
        %603 = vmatpush.bf16.xpose.msra.mxu0 0
        %604 = vmatpush.bf16.xpose.msra.mxu0 0
        %605 = vmatpush.bf16.xpose.msra.mxu0 0
        %606 = vmatpush.bf16.xpose.msra.mxu0 0
        %607 = vmatpush.bf16.xpose.msra.mxu0 0
        %608 = vmatpush.bf16.xpose.msra.mxu0 0
        %609 = vmatpush.bf16.xpose.msra.mxu0 %v600
        %610 = vmatmul.bf16.gmra.mxu0 %v597
        %v611 = vpop.f32.mrf.mxu0
        %v612 = vadd.f32 %v591, %v611
        %v613 = vpop.f32.mrf.mxu0
        %614 = vdwg.mxu0
        %v615 = vadd.f32 %v612, %v458
        %v616 = vsel %vm467, %v615, -inf
        %617 = vmax.xlane.f32.xlu0 %v616
        %v618 = vpop.xlane.xlu0 %617
        %v619 = vsub.f32 %v615, %v618
        %v620 = vmul.f32 %v619, 1.442695
        %v621 = vpow.pop %v620
        %v622 = vsel %vm467, %v621, 0.0
        %623 = vadd.xlane.f32.xlu0 %v622
        %v624 = vpop.xlane.xlu0 %623
        %v625 = vrcp.pop %v624
        %v626 = vmul.f32 %v621, %v625
        %v627 = vpack.c.bf16 %v626, %v626
        %628 = vrot.lane.b32.xlu0 %v464, 48
        %v629 = vpop.permute.xlu0 %628
        %v631 = vsel %vm467, %v627, 0
        %v634 = vsel %vm505, %v629, 0
        %636 = vmatpush.bf16.msra.mxu0 0
        %637 = vmatpush.bf16.msra.mxu0 0
        %638 = vmatpush.bf16.msra.mxu0 0
        %639 = vmatpush.bf16.msra.mxu0 0
        %640 = vmatpush.bf16.msra.mxu0 0
        %641 = vmatpush.bf16.msra.mxu0 0
        %642 = vmatpush.bf16.msra.mxu0 0
        %643 = vmatpush.bf16.msra.mxu0 %v634
        %644 = vmatmul.bf16.gmra.mxu0 %v631
        %v645 = vpop.f32.mrf.mxu0
        %v646 = vadd.f32 0.0, %v645
        %v647 = vpop.f32.mrf.mxu0
        %648 = vdwg.mxu0
        %650 = vrot.lane.b32.xlu0 %v646, 16
        %v651 = vpop.permute.xlu0 %650
        %vm653 = vcmask 195712
        %654 = vst.msk [vmem:[#allocation2] sm:$0xff] %vm653, %v651
        %s655 = scalar_lea.vmem [#allocation6], 12
        %v656 = vld [vmem:[%s655] sm:$0xf]
        %v657 = vunpack.c.l.bf16 %v656
        %658 = vrot.lane.b32.xlu0 %v464, 104
        %v659 = vpop.permute.xlu0 %658
        %660 = vrot.lane.b32.xlu0 %v464, 72
        %v661 = vpop.permute.xlu0 %660
        %v663 = vsel %vm467, %v659, 0
        %v666 = vsel %vm467, %v661, 0
        %668 = vmatpush.bf16.xpose.msra.mxu0 0
        %669 = vmatpush.bf16.xpose.msra.mxu0 0
        %670 = vmatpush.bf16.xpose.msra.mxu0 0
        %671 = vmatpush.bf16.xpose.msra.mxu0 0
        %672 = vmatpush.bf16.xpose.msra.mxu0 0
        %673 = vmatpush.bf16.xpose.msra.mxu0 0
        %674 = vmatpush.bf16.xpose.msra.mxu0 0
        %675 = vmatpush.bf16.xpose.msra.mxu0 %v666
        %676 = vmatmul.bf16.gmra.mxu0 %v663
        %v677 = vpop.f32.mrf.mxu0
        %v678 = vadd.f32 %v657, %v677
        %v679 = vpop.f32.mrf.mxu0
        %680 = vdwg.mxu0
        %v681 = vadd.f32 %v678, %v458
        %v682 = vsel %vm467, %v681, -inf
        %683 = vmax.xlane.f32.xlu0 %v682
        %v684 = vpop.xlane.xlu0 %683
        %v685 = vsub.f32 %v681, %v684
        %v686 = vmul.f32 %v685, 1.442695
        %v687 = vpow.pop %v686
        %v688 = vsel %vm467, %v687, 0.0
        %689 = vadd.xlane.f32.xlu0 %v688
        %v690 = vpop.xlane.xlu0 %689
        %v691 = vrcp.pop %v690
        %v692 = vmul.f32 %v687, %v691
        %v693 = vpack.c.bf16 %v692, %v692
        %694 = vrot.lane.b32.xlu0 %v464, 40
        %v695 = vpop.permute.xlu0 %694
        %v697 = vsel %vm467, %v693, 0
        %v700 = vsel %vm505, %v695, 0
        %702 = vmatpush.bf16.msra.mxu0 0
        %703 = vmatpush.bf16.msra.mxu0 0
        %704 = vmatpush.bf16.msra.mxu0 0
        %705 = vmatpush.bf16.msra.mxu0 0
        %706 = vmatpush.bf16.msra.mxu0 0
        %707 = vmatpush.bf16.msra.mxu0 0
        %708 = vmatpush.bf16.msra.mxu0 0
        %709 = vmatpush.bf16.msra.mxu0 %v700
        %710 = vmatmul.bf16.gmra.mxu0 %v697
        %v711 = vpop.f32.mrf.mxu0
        %v712 = vadd.f32 0.0, %v711
        %v713 = vpop.f32.mrf.mxu0
        %714 = vdwg.mxu0
        %716 = vrot.lane.b32.xlu0 %v712, 24
        %v717 = vpop.permute.xlu0 %716
        %vm719 = vcmask 261312
        %720 = vst.msk [vmem:[#allocation2] sm:$0xff] %vm719, %v717
        %v721 = vld [vmem:[#allocation2] sm:$0xff]
        %v722 = vpack.c.bf16 %v721, %v721
        %v723 = vld [vmem:[%s3] sm:$0xf]
        %v724 = vld [vmem:[%s3 + $0x4] sm:$0xf]
        %v725 = vld [vmem:[%s3 + $0x8] sm:$0xf]
        %v726 = vld [vmem:[%s3 + $0xc] sm:$0xf]
        %v731 = vunpack.c.l.b16 %v723
        %v732 = vunpack.c.l.b16 %v724
        %v733 = vunpack.c.l.b16 %v725
        %v734 = vunpack.c.l.b16 %v726
        %v735 = vpack.c.b16 %v732, %v731
        %v736 = vpack.c.b16 %v734, %v733
        %v740 = vsel %vm393, %v722, 0
        %742 = vmatpush.bf16.msra.mxu0 0
        %743 = vmatpush.bf16.msra.mxu0 0
        %744 = vmatpush.bf16.msra.mxu0 0
        %745 = vmatpush.bf16.msra.mxu0 0
        %746 = vmatpush.bf16.msra.mxu0 0
        %747 = vmatpush.bf16.msra.mxu0 0
        %748 = vmatpush.bf16.msra.mxu0 %v736
        %749 = vmatpush.bf16.msra.mxu0 %v735
        %750 = vmatmul.bf16.gmra.mxu0 %v740
        %v751 = vpop.f32.mrf.mxu0
        %v752 = vadd.f32 0.0, %v751
        %v753 = vpop.f32.mrf.mxu0
        %754 = vdwg.mxu0
        %v755 = vadd.f32 %v391, %v752
        %v756 = vmul.f32 %v755, %v755
        %v757 = vsel %vm393, %v756, 0.0
        %758 = vadd.xlane.f32.xlu0 %v757
        %v759 = vpop.xlane.xlu0 %758
        %v760 = vmul.f32 %v759, %v403
        %v761 = vadd.f32 %v760, 1e-06
        %v762 = vrsqrt.pop %v761
        %v763 = vmul.f32 %v762, %v761
        %v764 = vmul.f32 %v763, %v762
        %v765 = vmul.f32 0.5, %v764
        %v766 = vsub.f32 1.5, %v765
        %v767 = vmul.f32 %v762, %v766
        %vm768 = vweird.f32 %v761
        %vm769 = vweird.f32 %v762
        %vm770 = vmor %vm768, %vm769
        %v771 = vsel %vm770, %v762, %v767
        %v772 = vmul.f32 %v755, %v771
        %v773 = vld [vmem:[%s6] sm:$0x1]
        %v775 = vperm.slane %v773, 0
        %v777 = vmul.f32 %v772, %v775
        %v778 = vpack.c.bf16 %v777, %v777
        %v779 = vld [vmem:[#allocation8] sm:$0xf]
        %v780 = vld [vmem:[#allocation8 + $0x4] sm:$0xf]
        %v781 = vld [vmem:[#allocation8 + $0x8] sm:$0xf]
        %v782 = vld [vmem:[#allocation8 + $0xc] sm:$0xf]
        %v787 = vunpack.c.l.b16 %v779
        %v788 = vunpack.c.l.b16 %v780
        %v789 = vunpack.c.l.b16 %v781
        %v790 = vunpack.c.l.b16 %v782
        %v791 = vpack.c.b16 %v788, %v787
        %v792 = vpack.c.b16 %v790, %v789
        %v796 = vsel %vm393, %v778, 0
        %798 = vmatpush.bf16.msra.mxu0 0
        %799 = vmatpush.bf16.msra.mxu0 0
        %800 = vmatpush.bf16.msra.mxu0 0
        %801 = vmatpush.bf16.msra.mxu0 0
        %802 = vmatpush.bf16.msra.mxu0 0
        %803 = vmatpush.bf16.msra.mxu0 0
        %804 = vmatpush.bf16.msra.mxu0 %v792
        %805 = vmatpush.bf16.msra.mxu0 %v791
        %806 = vmatmul.bf16.gmra.mxu0 %v796
        %v807 = vpop.f32.mrf.mxu0
        %v808 = vadd.f32 0.0, %v807
        %v809 = vpop.f32.mrf.mxu0
        %810 = vdwg.mxu0
        %v811 = vmul.f32 %v808, 0.5
        %v812 = vmul.f32 %v808, 0.044715
        %v813 = vmul.f32 %v812, %v808
        %v814 = vmul.f32 %v813, %v808
        %v815 = vadd.f32 %v808, %v814
        %v816 = vmul.f32 %v815, 0.7978846
        %v817 = vtanh.pop %v816
        %v818 = vadd.f32 %v817, 1.0
        %v819 = vmul.f32 %v811, %v818
        %821 = vrot.lane.b32.xlu0 %v808, 64
        %v822 = vpop.permute.xlu0 %821
        %v824 = vmul.f32 %v819, %v822
        %v825 = vpack.c.bf16 %v824, %v824
        %v826 = vld [vmem:[%s8] sm:$0xf]
        %v827 = vld [vmem:[%s8 + $0x4] sm:$0xf]
        %v828 = vld [vmem:[%s8 + $0x8] sm:$0xf]
        %v829 = vld [vmem:[%s8 + $0xc] sm:$0xf]
        %v830 = vld [vmem:[%s8 + $0x10] sm:$0xf]
        %v831 = vld [vmem:[%s8 + $0x14] sm:$0xf]
        %v832 = vld [vmem:[%s8 + $0x18] sm:$0xf]
        %v833 = vld [vmem:[%s8 + $0x1c] sm:$0xf]
        %v842 = vunpack.c.l.b16 %v826
        %v843 = vunpack.c.l.b16 %v827
        %v844 = vunpack.c.l.b16 %v828
        %v845 = vunpack.c.l.b16 %v829
        %v846 = vunpack.c.l.b16 %v830
        %v847 = vunpack.c.l.b16 %v831
        %v848 = vunpack.c.l.b16 %v832
        %v849 = vunpack.c.l.b16 %v833
        %v850 = vpack.c.b16 %v843, %v842
        %v851 = vpack.c.b16 %v845, %v844
        %v852 = vpack.c.b16 %v847, %v846
        %v853 = vpack.c.b16 %v849, %v848
        %vm858 = vcmask 523264
        %v860 = vsel %vm858, %v825, 0
        %862 = vmatpush.bf16.msra.mxu0 0
        %863 = vmatpush.bf16.msra.mxu0 0
        %864 = vmatpush.bf16.msra.mxu0 0
        %865 = vmatpush.bf16.msra.mxu0 0
        %866 = vmatpush.bf16.msra.mxu0 %v853
        %867 = vmatpush.bf16.msra.mxu0 %v852
        %868 = vmatpush.bf16.msra.mxu0 %v851
        %869 = vmatpush.bf16.msra.mxu0 %v850
        %870 = vmatmul.bf16.gmra.mxu0 %v860
        %v871 = vpop.f32.mrf.mxu0
        %v872 = vadd.f32 0.0, %v871
        %v873 = vpop.f32.mrf.mxu0
        %874 = vdwg.mxu0
        %v875 = vadd.f32 %v755, %v872
        %876 = vst.msk [vmem:[%s382] sm:$0xff] %vm393, %v875
        %s877 = sand.u32 %s232, 1
        %s878 = scalar_lea.sflag [#allocation5], %s877
        %s879 = sand.u32 %s232, 1
        %s880 = smul.addr %s879, 8
        %s881 = scalar_lea.vmem [#allocation9], %s880
        // Predicated region
        $region69: #{tpu_custom_call.1} parent=55 // pred_check
          %p882 = pneg %p242
        $region70: #{tpu_custom_call.1} parent=55 // pred_check_branch
          %884 = sbr.rel (%p882) target = $region72
        $region71: #{tpu_custom_call.1} parent=55 // pred_region
          %886 = vsyncadd %s878, 0
          %s887 = smul.addr %s25, 8
          %s888 = scalar_lea.hbm %s9, %s887
          %s890 = sshll.u32 %s881, 4
          %s891 = int_to_ptr.vmem [resolvable:$true] %s890
          %s892 = sshll.u32 %s888, 4
          %s893 = int_to_ptr.hbm [resolvable:$true] %s892
          %895 = dma.vmem_to_hbm [thread:$0]  %s891, 128, %s893, %s878
        $region72: #{tpu_custom_call.1} parent=55 // pred_fallthru
          _
      $region56: #{tpu_custom_call.1} parent=5 // pred_fallthru
        _
      %p896 = scmp.le.s32.totalorder 2, %s20
      // Predicated region
      $region73: #{tpu_custom_call.1} parent=5 // pred_check
        %p897 = pneg %p896
      $region74: #{tpu_custom_call.1} parent=5 // pred_check_branch
        %899 = sbr.rel (%p897) target = $region76
      $region75: #{tpu_custom_call.1} parent=5 // pred_region
        %s900 = ssub.s32 %s20, 2
        // Predicated region
        $region77: #{tpu_custom_call.1} parent=75 // pred_check
          %p901 = pneg %p248
        $region78: #{tpu_custom_call.1} parent=75 // pred_check_branch
          %903 = sbr.rel (%p901) target = $region80
        $region79: #{tpu_custom_call.1} parent=75 // pred_region
          %s904 = sand.u32 %s233, 1
          %s905 = scalar_lea.sflag [#allocation5], %s904
          %s906 = sand.u32 %s233, 1
          %s907 = smul.addr %s906, 8
          %s908 = scalar_lea.vmem [#allocation9], %s907
          %910 = dma.done %s905, 128
        $region80: #{tpu_custom_call.1} parent=75 // pred_fallthru
          _
      $region76: #{tpu_custom_call.1} parent=5 // pred_fallthru
        _
    $region6: #{tpu_custom_call.1} parent=1 // loop_footer
      %s24 = sadd.s32 1, %s20
    $region7: #{tpu_custom_call.1} parent=1 // loop_footer_branch
      %19 = sbr.rel target = $region3
    $region8: #{tpu_custom_call.1} parent=1 // loop_exit
      _
    %911 = vsyncpa [#allocation4], 1
    %s912 = scalar_lea.sflag [#allocation4], 1
    %913 = vsyncpa %s912, 1
    %914 = vsyncpa [#allocation7], 1
    %915 = vsyncpa [#allocation5], 1
    %s916 = scalar_lea.sflag [#allocation5], 1
    %917 = vsyncpa %s916, 1

</llo_original>
